<compile_context>
chip_gen: v6e
topology: v6e:2x2x1
jax: 0.10.0
libtpu: 0.0.40
codegen_flags: <defaults>
</compile_context>

<pallas_src>
import functools

import jax
import jax.numpy as jnp
from jax.experimental import pallas as pl
from jax.experimental.pallas import tpu as pltpu

_LANE = 128
_EPS = 1e-5


def _num_tensorcores():
    """Best-effort TensorCores-per-device (2 on v7x, else 1)."""
    try:
        kind = jax.devices()[0].device_kind.lower()
    except Exception:
        return 1
    return 2 if "v7" in kind else 1


def _vmem_capacity_bytes():
    try:
        return int(pltpu.get_tpu_info().vmem_capacity_bytes)
    except Exception:
        return 64 << 20  # conservative default (v7x per-TensorCore VMEM)


def _dice_partial_kernel(x_ref, t_ref, o_ref, *, block_rows, kb, nb, n_valid,
                         need_mask):
    p = pl.program_id(0)   # shard (split across TensorCores when available)
    k = pl.program_id(1)   # row-block within shard (reduction, "arbitrary")

    @pl.when(k == 0)
    def _init():
        o_ref[...] = jnp.zeros_like(o_ref)

    x = x_ref[...].astype(jnp.float32)
    t = t_ref[...].astype(jnp.float32)

    # Exact sigmoid: exp on EUP + true divide. HBM-bound kernel -> free, and
    # exp(-x) -> +inf for very negative logits gives exactly 1/(1+inf) = 0.
    s = 1.0 / (1.0 + jnp.exp(-x))

    spt = s + t            # contributes sum(sigmoid(x)) + sum(t)
    sst = s * t            # contributes sum(sigmoid(x) * t)

    rows8 = (block_rows % 8 == 0)

    def _accumulate(a, b):
        if rows8:
            # Full-vreg (8,128) accumulators: unmasked loads/stores, no
            # partial-sublane RMW.
            o_ref[0, :, :] += jnp.sum(a.reshape(-1, 8, _LANE), axis=0)
            o_ref[1, :, :] += jnp.sum(b.reshape(-1, 8, _LANE), axis=0)
        else:
            # Tiny single-block fallback (block_rows == rows, rows % 8 != 0).
            o_ref[0, 0:1, :] += jnp.sum(a, axis=0, keepdims=True)
            o_ref[1, 0:1, :] += jnp.sum(b, axis=0, keepdims=True)

    if not need_mask:
        _accumulate(spt, sst)
    else:
        rb = p * kb + k          # global row-block index
        last = nb - 1            # only the last real block (and clamped
                                 # duplicates, rb >= nb) need masking

        @pl.when(rb < last)
        def _interior():
            _accumulate(spt, sst)

        @pl.when(rb >= last)
        def _tail():
            # Row-granular validity test (int32-safe for huge inputs): a row is
            # fully valid if its global index < n_valid // 128; the boundary
            # row is valid only for lanes < n_valid % 128.
            row = jax.lax.broadcasted_iota(jnp.int32, x.shape, 0)
            lane = jax.lax.broadcasted_iota(jnp.int32, x.shape, 1)
            grow = rb * block_rows + row
            n_full = n_valid // _LANE
            n_rem = n_valid % _LANE
            valid = (grow < n_full) | ((grow == n_full) & (lane < n_rem))
            _accumulate(jnp.where(valid, spt, 0.0),
                        jnp.where(valid, sst, 0.0))


def dice_with_logits_loss(inputs, targets, *, block_rows=None, num_partials=None):
    """Pallas port of DiceWithLogitsLoss.forward(inputs, targets)."""
    x = inputs.reshape(-1)
    t = targets.reshape(-1)
    n = int(x.shape[0])

    rem = n % _LANE
    if rem:
        # TODO(synk): lane-misaligned inputs still pay one jnp.pad copy; a
        # fully copy-free tail would need a manual-DMA path.
        x = jnp.pad(x, (0, _LANE - rem))
        t = jnp.pad(t, (0, _LANE - rem))
    rows = x.shape[0] // _LANE
    x2 = x.reshape(rows, _LANE)   # copy-free reshape when rem == 0
    t2 = t.reshape(rows, _LANE)

    # ---- hardware-aware sizing -------------------------------------------
    vmem_cap = _vmem_capacity_bytes()
    n_cores = _num_tensorcores()

    # dtype-scaled streaming block: ~8 MiB combined HBM traffic per grid step
    # (8192 rows for f32, 16384 for bf16, ...), amortizing per-step overhead.
    itemsize = max(x2.dtype.itemsize, t2.dtype.itemsize)
    if block_rows is None:
        block_rows = (8192 * 4) // int(itemsize)
    bytes_per_row = _LANE * (x2.dtype.itemsize + t2.dtype.itemsize)
    # Double-buffered input blocks must stay within ~1/4 of physical VMEM.
    max_budget_rows = max(32, (vmem_cap // 4) // (2 * bytes_per_row))
    block_rows = int(min(int(block_rows), rows, max_budget_rows))
    if block_rows < rows:
        block_rows = max(32, (block_rows // 32) * 32)
        if block_rows >= rows:
            block_rows = rows

    nb = -(-rows // block_rows)                      # total row-blocks
    if num_partials is None:
        num_partials = n_cores                       # 1 on v5e/v6e, 2 on v7x
    p_eff = max(1, min(int(num_partials), nb))       # shards
    kb = -(-nb // p_eff)                             # row-blocks per shard
    need_mask = (n != rows * _LANE) or (rows % block_rows != 0) or (kb * p_eff != nb)

    kernel = functools.partial(
        _dice_partial_kernel,
        block_rows=block_rows, kb=kb, nb=nb, n_valid=n, need_mask=need_mask)

    def in_map(p, k):
        # Clamp so we never index past the last block; duplicate reads are
        # masked to zero in-kernel.
        return (jnp.minimum(p * kb + k, nb - 1), 0)

    in_block_bytes = block_rows * bytes_per_row
    vmem_limit = int(min(max(2 * in_block_bytes + (8 << 20), 32 << 20),
                         (vmem_cap * 3) // 4))

    arb = getattr(pltpu, "ARBITRARY", "arbitrary")
    if p_eff > 1 and p_eff == n_cores:
        # Only core_parallel actually splits the shard axis across TensorCores
        # on v7x; fall back to "parallel" if the enum is unavailable.
        lead_sem = getattr(pltpu, "CORE_PARALLEL", "parallel")
    else:
        lead_sem = arb

    parts = pl.pallas_call(
        kernel,
        out_shape=jax.ShapeDtypeStruct((p_eff, 2, 8, _LANE), jnp.float32),
        grid_spec=pltpu.PrefetchScalarGridSpec(
            num_scalar_prefetch=0,
            grid=(p_eff, kb),
            in_specs=[
                pl.BlockSpec((block_rows, _LANE), in_map),
                pl.BlockSpec((block_rows, _LANE), in_map),
            ],
            out_specs=pl.BlockSpec((None, 2, 8, _LANE),
                                   lambda p, k: (p, 0, 0, 0)),
        ),
        compiler_params=pltpu.CompilerParams(
            dimension_semantics=(lead_sem, arb),
            vmem_limit_bytes=vmem_limit,
        ),
    )(x2, t2)

    sums = jnp.sum(parts, axis=(0, 2, 3))   # [sum(sigmoid)+sum(t), sum(sigmoid*t)]
    denominator = sums[0] + jnp.float32(_EPS)
    numerator = 2.0 * sums[1] + jnp.float32(_EPS)
    return 1.0 - numerator / denominator


def _reference(inputs, targets):
    x = jax.nn.sigmoid(inputs.reshape(-1).astype(jnp.float32))
    t = targets.reshape(-1).astype(jnp.float32)
    denominator = x.sum() + t.sum() + _EPS
    numerator = 2.0 * jnp.sum(x * t) + _EPS
    return 1.0 - numerator / denominator


if __name__ == "__main__":
    key = jax.random.PRNGKey(0)
    k1, k2 = jax.random.split(key)

    # Primary test: NCHW-like logits + binary targets (layout is irrelevant,
    # DiceWithLogitsLoss flattens everything).
    inputs = jax.random.normal(k1, (2, 4, 16, 16), dtype=jnp.float32)
    targets = (jax.random.uniform(k2, (2, 4, 16, 16)) > 0.5).astype(jnp.float32)
    loss = jax.block_until_ready(dice_with_logits_loss(inputs, targets))
    ref = _reference(inputs, targets)
    assert jnp.allclose(loss, ref, atol=2e-3, rtol=2e-3), (loss, ref)

    # Ragged / lane-misaligned shape: exercises the tail mask + odd-row path.
    k3, k4 = jax.random.split(k1)
    xr = jax.random.normal(k3, (3, 5, 9, 11), dtype=jnp.float32)
    tr = (jax.random.uniform(k4, (3, 5, 9, 11)) > 0.5).astype(jnp.float32)
    lr = jax.block_until_ready(dice_with_logits_loss(xr, tr))
    assert jnp.allclose(lr, _reference(xr, tr), atol=2e-3, rtol=2e-3), (lr,)

    # bf16 inputs: dtype-scaled block sizing + in-kernel f32 cast.
    xb = jax.random.normal(k3, (2, 8, 128, 128), dtype=jnp.bfloat16)
    tb = (jax.random.uniform(k4, (2, 8, 128, 128)) > 0.5).astype(jnp.bfloat16)
    lb = jax.block_until_ready(dice_with_logits_loss(xb, tb))
    refb = _reference(xb.astype(jnp.float32), tb.astype(jnp.float32))
    assert jnp.allclose(lb, refb, atol=5e-3, rtol=5e-3), (lb, refb)

    # Forced multi-block / multi-shard config: exercises gated tail masking,
    # clamped duplicate blocks, and multi-step accumulation.
    xf = jax.random.normal(k3, (2, 8, 128, 128), dtype=jnp.float32)
    tf_ = (jax.random.uniform(k4, (2, 8, 128, 128)) > 0.5).astype(jnp.float32)
    lf = jax.block_until_ready(
        dice_with_logits_loss(xf, tf_, block_rows=96, num_partials=3))
    assert jnp.allclose(lf, _reference(xf, tf_), atol=2e-3, rtol=2e-3), (lf,)

    print("KERNEL_OK")
</pallas_src>

<mosaic_0001>
module attributes {stable_mosaic.version = 11 : i64} {
  func.func @_dice_partial_kernel(%arg0: i32, %arg1: i32, %arg2: memref<16x128xf32, #tpu.memory_space<vmem>>, %arg3: memref<16x128xf32, #tpu.memory_space<vmem>>, %arg4: memref<1x2x8x128xf32, #tpu.memory_space<vmem>>) attributes {dimension_semantics = [#tpu.dimension_semantics<arbitrary>, #tpu.dimension_semantics<arbitrary>], iteration_bounds = array<i64: 1, 1>, scalar_prefetch = 0 : i64, scratch_operands = 0 : i64, tpu.core_type = #tpu.core_type<tc>, window_params = [{transform_indices = @transform_0, window_bounds = array<i64: 16, 128>}, {transform_indices = @transform_1, window_bounds = array<i64: 16, 128>}, {transform_indices = @transform_2, window_bounds = array<i64: 1, 2, 8, 128>}]} {
    %c0_i32 = arith.constant 0 : i32
    %0 = arith.cmpi eq, %arg1, %c0_i32 : i32
    %1 = arith.extui %0 : i1 to i32
    %c0_i32_0 = arith.constant 0 : i32
    %2 = arith.cmpi ne, %1, %c0_i32_0 : i32
    scf.if %2 {
      %cst_23 = arith.constant 0.000000e+00 : f32
      %30 = vector.broadcast %cst_23 : f32 to vector<2x8x128xf32>
      %c0_24 = arith.constant 0 : index
      %c0_25 = arith.constant 0 : index
      %c0_26 = arith.constant 0 : index
      %c0_27 = arith.constant 0 : index
      %31 = vector.load %arg4[%c0_24, %c0_25, %c0_26, %c0_27] : memref<1x2x8x128xf32, #tpu.memory_space<vmem>>, vector<1x2x8x128xf32>
      %32 = vector.shape_cast %31 : vector<1x2x8x128xf32> to vector<2x8x128xf32>
      %33 = vector.shape_cast %30 : vector<2x8x128xf32> to vector<1x2x8x128xf32>
      tpu.vector_store %arg4[%c0_24, %c0_25, %c0_26, %c0_27], %33 {strides = array<i32>} : memref<1x2x8x128xf32, #tpu.memory_space<vmem>>, vector<1x2x8x128xf32>,
    } else {
    }
    %c0 = arith.constant 0 : index
    %c0_1 = arith.constant 0 : index
    %3 = vector.load %arg2[%c0, %c0_1] : memref<16x128xf32, #tpu.memory_space<vmem>>, vector<16x128xf32>
    %c0_2 = arith.constant 0 : index
    %c0_3 = arith.constant 0 : index
    %4 = vector.load %arg3[%c0_2, %c0_3] : memref<16x128xf32, #tpu.memory_space<vmem>>, vector<16x128xf32>
    %cst = arith.constant 0.000000e+00 : f32
    %5 = vector.broadcast %cst : f32 to vector<16x128xf32>
    %6 = arith.subf %5, %3 : vector<16x128xf32>
    %7 = math.exp %6 : vector<16x128xf32>
    %cst_4 = arith.constant 1.000000e+00 : f32
    %8 = vector.broadcast %cst_4 : f32 to vector<16x128xf32>
    %9 = arith.addf %8, %7 : vector<16x128xf32>
    %cst_5 = arith.constant 1.000000e+00 : f32
    %10 = vector.broadcast %cst_5 : f32 to vector<16x128xf32>
    %11 = arith.divf %10, %9 : vector<16x128xf32>
    %12 = arith.addf %11, %4 : vector<16x128xf32>
    %13 = arith.mulf %11, %4 : vector<16x128xf32>
    %c0_6 = arith.constant 0 : index
    %c0_7 = arith.constant 0 : index
    %c0_8 = arith.constant 0 : index
    %c0_9 = arith.constant 0 : index
    %14 = vector.load %arg4[%c0_6, %c0_7, %c0_8, %c0_9] : memref<1x2x8x128xf32, #tpu.memory_space<vmem>>, vector<1x1x8x128xf32>
    %15 = vector.shape_cast %14 : vector<1x1x8x128xf32> to vector<8x128xf32>
    %16 = vector.shape_cast %12 : vector<16x128xf32> to vector<2x8x128xf32>
    %cst_10 = arith.constant dense<0.000000e+00> : vector<8x128xf32>
    %17 = vector.multi_reduction <add>, %16, %cst_10 [0] : vector<2x8x128xf32> to vector<8x128xf32>
    %18 = arith.addf %15, %17 : vector<8x128xf32>
    %c0_11 = arith.constant 0 : index
    %c0_12 = arith.constant 0 : index
    %c0_13 = arith.constant 0 : index
    %c0_14 = arith.constant 0 : index
    %19 = vector.load %arg4[%c0_11, %c0_12, %c0_13, %c0_14] : memref<1x2x8x128xf32, #tpu.memory_space<vmem>>, vector<1x1x8x128xf32>
    %20 = vector.shape_cast %19 : vector<1x1x8x128xf32> to vector<8x128xf32>
    %21 = vector.shape_cast %18 : vector<8x128xf32> to vector<1x1x8x128xf32>
    tpu.vector_store %arg4[%c0_11, %c0_12, %c0_13, %c0_14], %21 {strides = array<i32>} : memref<1x2x8x128xf32, #tpu.memory_space<vmem>>, vector<1x1x8x128xf32>,
    %c0_15 = arith.constant 0 : index
    %c1 = arith.constant 1 : index
    %c0_16 = arith.constant 0 : index
    %c0_17 = arith.constant 0 : index
    %22 = vector.load %arg4[%c0_15, %c1, %c0_16, %c0_17] : memref<1x2x8x128xf32, #tpu.memory_space<vmem>>, vector<1x1x8x128xf32>
    %23 = vector.shape_cast %22 : vector<1x1x8x128xf32> to vector<8x128xf32>
    %24 = vector.shape_cast %13 : vector<16x128xf32> to vector<2x8x128xf32>
    %cst_18 = arith.constant dense<0.000000e+00> : vector<8x128xf32>
    %25 = vector.multi_reduction <add>, %24, %cst_18 [0] : vector<2x8x128xf32> to vector<8x128xf32>
    %26 = arith.addf %23, %25 : vector<8x128xf32>
    %c0_19 = arith.constant 0 : index
    %c1_20 = arith.constant 1 : index
    %c0_21 = arith.constant 0 : index
    %c0_22 = arith.constant 0 : index
    %27 = vector.load %arg4[%c0_19, %c1_20, %c0_21, %c0_22] : memref<1x2x8x128xf32, #tpu.memory_space<vmem>>, vector<1x1x8x128xf32>
    %28 = vector.shape_cast %27 : vector<1x1x8x128xf32> to vector<8x128xf32>
    %29 = vector.shape_cast %26 : vector<8x128xf32> to vector<1x1x8x128xf32>
    tpu.vector_store %arg4[%c0_19, %c1_20, %c0_21, %c0_22], %29 {strides = array<i32>} : memref<1x2x8x128xf32, #tpu.memory_space<vmem>>, vector<1x1x8x128xf32>,
    return
  }
  func.func @transform_0(%arg0: i32, %arg1: i32) -> (i32, i32) {
    %c1_i32 = arith.constant 1 : i32
    %0 = arith.muli %arg0, %c1_i32 : i32
    %1 = arith.addi %0, %arg1 : i32
    %c0_i32 = arith.constant 0 : i32
    %2 = arith.minsi %1, %c0_i32 : i32
    %c0_i32_0 = arith.constant 0 : i32
    %c0_i32_1 = arith.constant 0 : i32
    return %2, %c0_i32_0 : i32, i32
  }
  func.func @transform_1(%arg0: i32, %arg1: i32) -> (i32, i32) {
    %c1_i32 = arith.constant 1 : i32
    %0 = arith.muli %arg0, %c1_i32 : i32
    %1 = arith.addi %0, %arg1 : i32
    %c0_i32 = arith.constant 0 : i32
    %2 = arith.minsi %1, %c0_i32 : i32
    %c0_i32_0 = arith.constant 0 : i32
    %c0_i32_1 = arith.constant 0 : i32
    return %2, %c0_i32_0 : i32, i32
  }
  func.func @transform_2(%arg0: i32, %arg1: i32) -> (i32, i32, i32, i32) {
    %c0_i32 = arith.constant 0 : i32
    %c0_i32_0 = arith.constant 0 : i32
    %c0_i32_1 = arith.constant 0 : i32
    %c0_i32_2 = arith.constant 0 : i32
    return %arg0, %c0_i32, %c0_i32_0, %c0_i32_1 : i32, i32, i32, i32
  }
}

</mosaic_0001>

<llo_original>
// kernel: tpu_custom_call.1
$region0: #{tpu_custom_call.1}
  #allocation0 [shape = 'u32[]', space=smem, size = 0x4, offset = 0x4, fixed_abs, tag = 'smem constant byte address 0x4 - core index']
  #allocation1 [shape = 'u32[144,128]{1,0:T(1,128)}', space=vmem, size = 0x12000, scoped, tag = 'internal scratch']
  %s0 = inlined_call_operand.hbm [shape: f32[16,128], index: 0, kind: input, shape index: {}]
  %s1 = inlined_call_operand.hbm [shape: f32[16,128], index: 1, kind: input, shape index: {}]
  %s2 = inlined_call_operand.hbm [shape: f32[1,2,8,128], index: 2, kind: output, shape index: {}]
  %s3 = sld [smem:[#allocation0]]
  $region30: #{tpu_custom_call.1} parent=0
    _
  %s5 = ssub.s32 1, %s3
  %s6 = scalar_select 0, %s5, %s3
  $region1: #{tpu_custom_call.1} parent=0
    #allocation2 [shape = 'u8[8192]{0}', space=vmem, size = 0x2000, scoped, tag = 'input window, operand 0, single buffered']
    #allocation3 [shape = 's32[1]{0}', space=sflag, size = 0x4, scoped, tag = 'scoped memory for tpu_custom_call.1']
    #allocation4 [shape = 's32[1]{0}', space=sflag, size = 0x4, scoped, tag = 'scoped memory for tpu_custom_call.1']
    #allocation5 [shape = 'u8[8192]{0}', space=vmem, size = 0x2000, scoped, tag = 'input window, operand 1, single buffered']
    #allocation6 [shape = 's32[1]{0}', space=sflag, size = 0x4, scoped, tag = 'scoped memory for tpu_custom_call.1']
    #allocation7 [shape = 'u8[8192]{0}', space=vmem, size = 0x2000, scoped, tag = 'output window, operand 0, single buffered']
    %7 = vsyncpa [#allocation3], 0
    %8 = vsyncpa [#allocation6], 0
    %9 = vsyncpa [#allocation4], 0
    // Predicated region
    $region2: #{tpu_custom_call.1} parent=1 // pred_check
      _
    $region3: #{tpu_custom_call.1} parent=1 // pred_check_branch
      %11 = sbr.rel (0) target = $region5
    $region4: #{tpu_custom_call.1} parent=1 // pred_region
      %s12 = sadd.s32 0, 0
      %p13 = scmp.lt.s32.totalorder %s12, 0
      %s14 = scalar_select %p13, %s12, 0
      %s15 = smul.u32 2, %s14
      %s17 = ssub.s32 256, 256
      %18 = vsyncadd [#allocation3], %s17
      %s19 = smul.addr %s15, 128
      %s20 = scalar_lea.hbm %s0, %s19
      %s21 = sshll.u32 [#allocation2], 4
      %s22 = int_to_ptr.vmem [resolvable:$true] %s21
      %27 = dma.hbm_to_vmem [thread:$0]  %s20, 256, %s22, [#allocation3], 128, 128, 8
    $region5: #{tpu_custom_call.1} parent=1 // pred_fallthru
      _
    // Predicated region
    $region6: #{tpu_custom_call.1} parent=1 // pred_check
      _
    $region7: #{tpu_custom_call.1} parent=1 // pred_check_branch
      %29 = sbr.rel (0) target = $region9
    $region8: #{tpu_custom_call.1} parent=1 // pred_region
      %s30 = sadd.s32 0, 0
      %p31 = scmp.lt.s32.totalorder %s30, 0
      %s32 = scalar_select %p31, %s30, 0
      %s33 = smul.u32 2, %s32
      %s35 = ssub.s32 256, 256
      %36 = vsyncadd [#allocation6], %s35
      %s37 = smul.addr %s33, 128
      %s38 = scalar_lea.hbm %s1, %s37
      %s39 = sshll.u32 [#allocation5], 4
      %s40 = int_to_ptr.vmem [resolvable:$true] %s39
      %45 = dma.hbm_to_vmem [thread:$0]  %s38, 256, %s40, [#allocation6], 128, 128, 8
    $region9: #{tpu_custom_call.1} parent=1 // pred_fallthru
      _
    // Predicated region
    $region10: #{tpu_custom_call.1} parent=1 // pred_check
      _
    $region11: #{tpu_custom_call.1} parent=1 // pred_check_branch
      %47 = sbr.rel (0) target = $region13
    $region12: #{tpu_custom_call.1} parent=1 // pred_region
      %48 = dma.done [#allocation3], 256
    $region13: #{tpu_custom_call.1} parent=1 // pred_fallthru
      _
    // Predicated region
    $region14: #{tpu_custom_call.1} parent=1 // pred_check
      _
    $region15: #{tpu_custom_call.1} parent=1 // pred_check_branch
      %50 = sbr.rel (0) target = $region17
    $region16: #{tpu_custom_call.1} parent=1 // pred_region
      %51 = dma.done [#allocation6], 256
    $region17: #{tpu_custom_call.1} parent=1 // pred_fallthru
      _
    %s52 = sadd.s32 0, 0
    %p53 = scmp.lt.s32.totalorder %s52, 0
    %s54 = scalar_select %p53, %s52, 0
    %s55 = smul.u32 2, %s54
    %s56 = sadd.s32 0, 0
    %p57 = scmp.lt.s32.totalorder %s56, 0
    %s58 = scalar_select %p57, %s56, 0
    %s59 = smul.u32 2, %s58
    %p60 = scmp.eq.s32.totalorder 0, 0
    // Predicated region
    $region18: #{tpu_custom_call.1} parent=1 // pred_check
      %p61 = pneg %p60
    $region19: #{tpu_custom_call.1} parent=1 // pred_check_branch
      %63 = sbr.rel (%p61) target = $region21
    $region20: #{tpu_custom_call.1} parent=1 // pred_region
      %64 = vst [vmem:[#allocation7] sm:$0xff] 0.0
      %65 = vst [vmem:[#allocation7 + $0x8] sm:$0xff] 0.0
    $region21: #{tpu_custom_call.1} parent=1 // pred_fallthru
      _
    %v66 = vld [vmem:[#allocation2] sm:$0xff]
    %v67 = vld [vmem:[#allocation2 + $0x8] sm:$0xff]
    %v68 = vld [vmem:[#allocation5] sm:$0xff]
    %v69 = vld [vmem:[#allocation5 + $0x8] sm:$0xff]
    %v70 = vsub.f32 0.0, %v66
    %v71 = vsub.f32 0.0, %v67
    %v72 = vmul.f32 %v70, 1.442695
    %v73 = vpow.pop %v72
    %v74 = vmul.f32 %v71, 1.442695
    %v75 = vpow.pop %v74
    %v76 = vadd.f32 %v73, 1.0
    %v77 = vadd.f32 %v75, 1.0
    %v78 = vrcp.pop %v76
    %v79 = vmul.f32 1.0, %v78
    %v80 = vrcp.pop %v77
    %v81 = vmul.f32 1.0, %v80
    %v82 = vadd.f32 %v79, %v68
    %v83 = vadd.f32 %v81, %v69
    %v84 = vmul.f32 %v79, %v68
    %v85 = vmul.f32 %v81, %v69
    %v86 = vld [vmem:[#allocation7] sm:$0xff]
    %v87 = vadd.f32 %v82, %v83
    %v88 = vadd.f32 %v86, %v87
    %89 = vst [vmem:[#allocation7] sm:$0xff] %v88
    %s90 = scalar_lea.vmem [#allocation7], 8
    %v91 = vld [vmem:[%s90] sm:$0xff]
    %v92 = vadd.f32 %v84, %v85
    %v93 = vadd.f32 %v91, %v92
    %94 = vst [vmem:[%s90] sm:$0xff] %v93
    // Predicated region
    $region22: #{tpu_custom_call.1} parent=1 // pred_check
      _
    $region23: #{tpu_custom_call.1} parent=1 // pred_check_branch
      %96 = sbr.rel (0) target = $region25
    $region24: #{tpu_custom_call.1} parent=1 // pred_region
      %s98 = ssub.s32 256, 256
      %99 = vsyncadd [#allocation4], %s98
      %s100 = sshll.u32 [#allocation7], 4
      %s101 = int_to_ptr.vmem [resolvable:$true] %s100
      %106 = dma.vmem_to_hbm [thread:$0]  %s101, 256, %s2, [#allocation4], 128, 128, 8
    $region25: #{tpu_custom_call.1} parent=1 // pred_fallthru
      _
    // Predicated region
    $region26: #{tpu_custom_call.1} parent=1 // pred_check
      _
    $region27: #{tpu_custom_call.1} parent=1 // pred_check_branch
      %108 = sbr.rel (0) target = $region29
    $region28: #{tpu_custom_call.1} parent=1 // pred_region
      %109 = dma.done [#allocation4], 256
    $region29: #{tpu_custom_call.1} parent=1 // pred_fallthru
      _
    %110 = vsyncpa [#allocation3], 1
    %111 = vsyncpa [#allocation6], 1
    %112 = vsyncpa [#allocation4], 1

</llo_original>
